<compile_context>
chip_gen: v7x
topology: tpu7x:2x2x1
jax: 0.10.0
libtpu: 0.0.40
codegen_flags: <defaults>
</compile_context>

<pallas_src>
import math

import jax
import jax.numpy as jnp
from jax.experimental import pallas as pl
from jax.experimental.pallas import tpu as pltpu

_EPS = 1e-5


def _round_up(n, m):
    return ((n + m - 1) // m) * m


def actor_kernel(x_ref, w1_ref, w2_ref, w3_ref, vec_ref, o_ref):
    """One grid step = one full BN batch of B rows.

    x_ref:  (B, S)   f32      (leading time axis squeezed by BlockSpec)
    w1_ref: (S, F1)  bf16
    w2_ref: (F1, F2) bf16
    w3_ref: (F2, A)  bf16     (A = true action_size, lane-unpadded)
    vec_ref:(4, F1)  f32      rows: [gamma1, beta1, b2 (pad), b3 (pad)]
    o_ref:  (B, A)   f32
    """
    F2 = w2_ref.shape[1]
    ACT = w3_ref.shape[1]

    # Coalesced small parameters (static slices -> no runtime cost).
    gamma = vec_ref[0:1, :]
    beta = vec_ref[1:2, :]
    b2 = vec_ref[2:3, :F2]
    b3 = vec_ref[3:4, :ACT]

    # fc1: bf16 operands, f32 accumulation on the MXU.  The fc1 bias is
    # omitted on purpose: training-mode BN's mean subtraction cancels it.
    x = x_ref[...].astype(jnp.bfloat16)
    h1 = jnp.dot(x, w1_ref[...], preferred_element_type=jnp.float32)

    # bn1 (training-mode batch statistics, biased variance, eps=1e-5) folded
    # into a per-feature scale/shift; rsqrt lands on the EUP slot.
    # Padded lanes: w1 cols are zero -> h1 col = 0, var = 0, and gamma = 0
    # (zero-padded) keeps scale/shift = 0, so padded lanes stay exactly 0.
    mean = jnp.mean(h1, axis=0, keepdims=True)
    var = jnp.mean((h1 - mean) ** 2, axis=0, keepdims=True)
    scale = gamma * jax.lax.rsqrt(var + _EPS)
    shift = beta - mean * scale
    h1 = jnp.maximum(h1 * scale + shift, 0.0)

    # fc2 + relu
    h2 = jnp.dot(h1.astype(jnp.bfloat16), w2_ref[...],
                 preferred_element_type=jnp.float32) + b2
    h2 = jnp.maximum(h2, 0.0)

    # fc3 + tanh (output is lane-narrow -> cheap masked store, no padding DMA)
    out = jnp.dot(h2.astype(jnp.bfloat16), w3_ref[...],
                  preferred_element_type=jnp.float32) + b3
    o_ref[...] = jnp.tanh(out)


def actor_forward(states, packed):
    """states: (B, S) or (T, B, S) float32; each (B, S) slice is one BN batch.

    packed: output of pack_actor_params.  Weights are DMA'd once and stay
    VMEM-resident across the T grid steps.
    """
    squeeze = states.ndim == 2
    if squeeze:
        states = states[None]
    T, B, S = states.shape
    ACT = int(packed["action_size"])
    F1 = packed["w1"].shape[1]
    F2 = packed["w2"].shape[1]

    args = (states, packed["w1"], packed["w2"], packed["w3"], packed["vec"])

    # Constant block index across the grid -> weights fetched once, resident.
    const2 = lambda t: (0, 0)
    in_specs = [
        pl.BlockSpec((None, B, S), lambda t: (t, 0, 0)),      # per-step state
        pl.BlockSpec(packed["w1"].shape, const2),
        pl.BlockSpec(packed["w2"].shape, const2),
        pl.BlockSpec(packed["w3"].shape, const2),
        pl.BlockSpec(packed["vec"].shape, const2),
    ]
    out_spec = pl.BlockSpec((None, B, ACT), lambda t: (t, 0, 0))

    weight_bytes = sum(int(packed[k].size) * packed[k].dtype.itemsize
                       for k in ("w1", "w2", "w3", "vec"))
    bytes_accessed = weight_bytes + states.size * 4 + T * B * ACT * 4
    cost = pl.CostEstimate(
        flops=2 * T * B * (S * F1 + F1 * F2 + F2 * ACT),
        transcendentals=T * (B * ACT + F1),          # tanh + rsqrt
        bytes_accessed=int(bytes_accessed),
    )

    out = pl.pallas_call(
        actor_kernel,
        out_shape=jax.ShapeDtypeStruct((T, B, ACT), jnp.float32),
        grid=(T,),
        in_specs=in_specs,
        out_specs=out_spec,
        compiler_params=pltpu.CompilerParams(
            dimension_semantics=("arbitrary",)),
        cost_estimate=cost,
    )(*args)
    return out[0] if squeeze else out


def init_actor_params(key, state_size, action_size, fc1_units=400, fc2_units=300):
    """Deterministic f32 init mirroring the PyTorch module's __init__."""
    k = jax.random.split(key, 6)

    def xavier_uniform(rng, fan_in, fan_out):
        bound = math.sqrt(6.0 / (fan_in + fan_out))
        # stored as (in, out): kernel computes x @ W + b (== PyTorch x @ W.T + b)
        return jax.random.uniform(rng, (fan_in, fan_out), jnp.float32, -bound, bound)

    def linear_bias(rng, fan_in, fan_out):
        bound = 1.0 / math.sqrt(fan_in)
        return jax.random.uniform(rng, (1, fan_out), jnp.float32, -bound, bound)

    return {
        "w1": xavier_uniform(k[0], state_size, fc1_units),
        "b1": linear_bias(k[1], state_size, fc1_units),
        "gamma1": jnp.ones((1, fc1_units), jnp.float32),
        "beta1": jnp.zeros((1, fc1_units), jnp.float32),
        "w2": xavier_uniform(k[2], fc1_units, fc2_units),
        "b2": linear_bias(k[3], fc1_units, fc2_units),
        "w3": jax.random.uniform(k[4], (fc2_units, action_size), jnp.float32,
                                 -0.003, 0.003),
        "b3": linear_bias(k[5], fc2_units, action_size),
    }


def pack_actor_params(params, lane=128):
    """Zero-pad hidden dims to multiples of 128, cast matmul weights to bf16,
    coalesce the small f32 vectors into one (4, F1) array, and drop b1
    (exactly cancelled by training-mode BN's mean subtraction).

    Invariant: gamma1/beta1 padding MUST be zeros so padded BN lanes stay 0
    (var=0 -> rsqrt(eps) is large, but gamma=0 zeroes it out)."""
    s, f1 = params["w1"].shape
    f2, act = params["w3"].shape
    F1, F2 = _round_up(f1, lane), _round_up(f2, lane)

    def pad2(a, rows, cols):
        return jnp.pad(a, ((0, rows - a.shape[0]), (0, cols - a.shape[1])))

    vec = jnp.concatenate([
        pad2(params["gamma1"], 1, F1),   # row 0
        pad2(params["beta1"], 1, F1),    # row 1
        pad2(params["b2"], 1, F1),       # row 2 (first F2 lanes valid)
        pad2(params["b3"], 1, F1),       # row 3 (first `act` lanes valid)
    ], axis=0)

    return {
        "action_size": act,
        "w1": pad2(params["w1"], s, F1).astype(jnp.bfloat16),
        "w2": pad2(params["w2"], F1, F2).astype(jnp.bfloat16),
        # w3 kept lane-unpadded: (F2, act) -> ~3 KiB instead of 96 KiB DMA.
        "w3": pad2(params["w3"], F2, act).astype(jnp.bfloat16),
        "vec": vec,
    }


def actor_reference(state, params):
    """Pure-JAX f32 reference (unpadded weights, matches the PyTorch forward
    in train() mode)."""
    h1 = state @ params["w1"] + params["b1"]
    mean = jnp.mean(h1, axis=0, keepdims=True)
    var = jnp.mean((h1 - mean) ** 2, axis=0, keepdims=True)
    h1 = (h1 - mean) / jnp.sqrt(var + _EPS)
    h1 = jnp.maximum(h1 * params["gamma1"] + params["beta1"], 0.0)
    h2 = jnp.maximum(h1 @ params["w2"] + params["b2"], 0.0)
    return jnp.tanh(h2 @ params["w3"] + params["b3"])


if __name__ == "__main__":
    key = jax.random.PRNGKey(0)
    k_param, k_state, k_seq = jax.random.split(key, 3)

    batch = 8
    state_size = 32
    action_size = 4

    params = init_actor_params(k_param, state_size, action_size,
                               fc1_units=400, fc2_units=300)
    packed = pack_actor_params(params)

    # Single BN batch (T=1 path).
    state = jax.random.normal(k_state, (batch, state_size), jnp.float32)
    out = jax.block_until_ready(actor_forward(state, packed))
    ref = actor_reference(state, params)
    assert out.shape == (batch, action_size)
    # bf16 weight/operand quantization on the MXU path -> loosened tolerance.
    assert jnp.max(jnp.abs(out - ref)) < 2e-2, "mismatch vs f32 reference (T=1)"

    # Multiple independent BN batches (grid path; weights resident in VMEM).
    T = 3
    states_seq = jax.random.normal(k_seq, (T, batch, state_size), jnp.float32)
    out_seq = jax.block_until_ready(actor_forward(states_seq, packed))
    assert out_seq.shape == (T, batch, action_size)
    for t in range(T):
        ref_t = actor_reference(states_seq[t], params)
        assert jnp.max(jnp.abs(out_seq[t] - ref_t)) < 2e-2, \
            f"mismatch vs f32 reference (t={t})"

    print("KERNEL_OK")
</pallas_src>

<mosaic_0001>
module attributes {stable_mosaic.version = 11 : i64} {
  func.func @actor_kernel(%arg0: i32, %arg1: memref<1x8x32xf32, #tpu.memory_space<vmem>>, %arg2: memref<32x512xbf16, #tpu.memory_space<vmem>>, %arg3: memref<512x384xbf16, #tpu.memory_space<vmem>>, %arg4: memref<384x4xbf16, #tpu.memory_space<vmem>>, %arg5: memref<4x512xf32, #tpu.memory_space<vmem>>, %arg6: memref<1x8x4xf32, #tpu.memory_space<vmem>>) attributes {dimension_semantics = [#tpu.dimension_semantics<arbitrary>], iteration_bounds = array<i64: 1>, scalar_prefetch = 0 : i64, scratch_operands = 0 : i64, tpu.core_type = #tpu.core_type<tc>, window_params = [{transform_indices = @transform_0, window_bounds = array<i64: 1, 8, 32>}, {pipeline_mode = #tpu.pipeline_mode<synchronous>, transform_indices = @transform_1, window_bounds = array<i64: 32, 512>}, {pipeline_mode = #tpu.pipeline_mode<synchronous>, transform_indices = @transform_2, window_bounds = array<i64: 512, 384>}, {pipeline_mode = #tpu.pipeline_mode<synchronous>, transform_indices = @transform_3, window_bounds = array<i64: 384, 4>}, {pipeline_mode = #tpu.pipeline_mode<synchronous>, transform_indices = @transform_4, window_bounds = array<i64: 4, 512>}, {transform_indices = @transform_5, window_bounds = array<i64: 1, 8, 4>}]} {
    %c0 = arith.constant 0 : index
    %c0_0 = arith.constant 0 : index
    %0 = vector.load %arg5[%c0, %c0_0] : memref<4x512xf32, #tpu.memory_space<vmem>>, vector<1x512xf32>
    %c1 = arith.constant 1 : index
    %c0_1 = arith.constant 0 : index
    %1 = vector.load %arg5[%c1, %c0_1] : memref<4x512xf32, #tpu.memory_space<vmem>>, vector<1x512xf32>
    %c2 = arith.constant 2 : index
    %c0_2 = arith.constant 0 : index
    %2 = vector.load %arg5[%c2, %c0_2] : memref<4x512xf32, #tpu.memory_space<vmem>>, vector<1x384xf32>
    %c3 = arith.constant 3 : index
    %c0_3 = arith.constant 0 : index
    %3 = vector.load %arg5[%c3, %c0_3] : memref<4x512xf32, #tpu.memory_space<vmem>>, vector<1x4xf32>
    %c0_4 = arith.constant 0 : index
    %c0_5 = arith.constant 0 : index
    %c0_6 = arith.constant 0 : index
    %4 = vector.load %arg1[%c0_4, %c0_5, %c0_6] : memref<1x8x32xf32, #tpu.memory_space<vmem>>, vector<1x8x32xf32>
    %5 = vector.shape_cast %4 : vector<1x8x32xf32> to vector<8x32xf32>
    %6 = arith.truncf %5 : vector<8x32xf32> to vector<8x32xbf16>
    %c0_7 = arith.constant 0 : index
    %c0_8 = arith.constant 0 : index
    %7 = vector.load %arg2[%c0_7, %c0_8] : memref<32x512xbf16, #tpu.memory_space<vmem>>, vector<32x512xbf16>
    %cst = arith.constant dense<0.000000e+00> : vector<8x512xf32>
    %8 = tpu.matmul %6, %7, %cst {dimension_numbers = #tpu.dot_dimension_numbers<[1], [0], [0], [1], [0, 0, 1, 1], [], []>} : vector<8x32xbf16>, vector<32x512xbf16>, vector<8x512xf32> -> vector<8x512xf32>
    %cst_9 = arith.constant dense<0.000000e+00> : vector<512xf32>
    %9 = vector.multi_reduction <add>, %8, %cst_9 [0] : vector<8x512xf32> to vector<512xf32>
    %10 = vector.shape_cast %9 : vector<512xf32> to vector<1x512xf32>
    %cst_10 = arith.constant 8.000000e+00 : f32
    %11 = vector.broadcast %cst_10 : f32 to vector<1x512xf32>
    %12 = arith.divf %10, %11 : vector<1x512xf32>
    %13 = vector.broadcast %12 : vector<1x512xf32> to vector<8x512xf32>
    %14 = arith.subf %8, %13 : vector<8x512xf32>
    %15 = arith.mulf %14, %14 : vector<8x512xf32>
    %cst_11 = arith.constant dense<0.000000e+00> : vector<512xf32>
    %16 = vector.multi_reduction <add>, %15, %cst_11 [0] : vector<8x512xf32> to vector<512xf32>
    %17 = vector.shape_cast %16 : vector<512xf32> to vector<1x512xf32>
    %cst_12 = arith.constant 8.000000e+00 : f32
    %18 = vector.broadcast %cst_12 : f32 to vector<1x512xf32>
    %19 = arith.divf %17, %18 : vector<1x512xf32>
    %cst_13 = arith.constant 9.99999974E-6 : f32
    %20 = vector.broadcast %cst_13 : f32 to vector<1x512xf32>
    %21 = arith.addf %19, %20 : vector<1x512xf32>
    %22 = math.rsqrt %21 : vector<1x512xf32>
    %23 = arith.mulf %0, %22 : vector<1x512xf32>
    %24 = arith.mulf %12, %23 : vector<1x512xf32>
    %25 = arith.subf %1, %24 : vector<1x512xf32>
    %26 = vector.broadcast %23 : vector<1x512xf32> to vector<8x512xf32>
    %27 = arith.mulf %8, %26 : vector<8x512xf32>
    %28 = vector.broadcast %25 : vector<1x512xf32> to vector<8x512xf32>
    %29 = arith.addf %27, %28 : vector<8x512xf32>
    %cst_14 = arith.constant 0.000000e+00 : f32
    %30 = vector.broadcast %cst_14 : f32 to vector<8x512xf32>
    %31 = arith.maximumf %29, %30 : vector<8x512xf32>
    %32 = arith.truncf %31 : vector<8x512xf32> to vector<8x512xbf16>
    %c0_15 = arith.constant 0 : index
    %c0_16 = arith.constant 0 : index
    %33 = vector.load %arg3[%c0_15, %c0_16] : memref<512x384xbf16, #tpu.memory_space<vmem>>, vector<512x384xbf16>
    %cst_17 = arith.constant dense<0.000000e+00> : vector<8x384xf32>
    %34 = tpu.matmul %32, %33, %cst_17 {dimension_numbers = #tpu.dot_dimension_numbers<[1], [0], [0], [1], [0, 0, 1, 1], [], []>} : vector<8x512xbf16>, vector<512x384xbf16>, vector<8x384xf32> -> vector<8x384xf32>
    %35 = vector.broadcast %2 : vector<1x384xf32> to vector<8x384xf32>
    %36 = arith.addf %34, %35 : vector<8x384xf32>
    %cst_18 = arith.constant 0.000000e+00 : f32
    %37 = vector.broadcast %cst_18 : f32 to vector<8x384xf32>
    %38 = arith.maximumf %36, %37 : vector<8x384xf32>
    %39 = arith.truncf %38 : vector<8x384xf32> to vector<8x384xbf16>
    %c0_19 = arith.constant 0 : index
    %c0_20 = arith.constant 0 : index
    %40 = vector.load %arg4[%c0_19, %c0_20] : memref<384x4xbf16, #tpu.memory_space<vmem>>, vector<384x4xbf16>
    %cst_21 = arith.constant dense<0.000000e+00> : vector<8x4xf32>
    %41 = tpu.matmul %39, %40, %cst_21 {dimension_numbers = #tpu.dot_dimension_numbers<[1], [0], [0], [1], [0, 0, 1, 1], [], []>} : vector<8x384xbf16>, vector<384x4xbf16>, vector<8x4xf32> -> vector<8x4xf32>
    %42 = vector.broadcast %3 : vector<1x4xf32> to vector<8x4xf32>
    %43 = arith.addf %41, %42 : vector<8x4xf32>
    %44 = math.tanh %43 : vector<8x4xf32>
    %c0_22 = arith.constant 0 : index
    %c0_23 = arith.constant 0 : index
    %c0_24 = arith.constant 0 : index
    %45 = vector.load %arg6[%c0_22, %c0_23, %c0_24] : memref<1x8x4xf32, #tpu.memory_space<vmem>>, vector<1x8x4xf32>
    %46 = vector.shape_cast %45 : vector<1x8x4xf32> to vector<8x4xf32>
    %47 = vector.shape_cast %44 : vector<8x4xf32> to vector<1x8x4xf32>
    tpu.vector_store %arg6[%c0_22, %c0_23, %c0_24], %47 {strides = array<i32>} : memref<1x8x4xf32, #tpu.memory_space<vmem>>, vector<1x8x4xf32>,
    return
  }
  func.func @transform_0(%arg0: i32) -> (i32, i32, i32) {
    %c0_i32 = arith.constant 0 : i32
    %c0_i32_0 = arith.constant 0 : i32
    %c0_i32_1 = arith.constant 0 : i32
    return %arg0, %c0_i32, %c0_i32_0 : i32, i32, i32
  }
  func.func @transform_1(%arg0: i32) -> (i32, i32) {
    %c0_i32 = arith.constant 0 : i32
    %c0_i32_0 = arith.constant 0 : i32
    %c0_i32_1 = arith.constant 0 : i32
    return %c0_i32, %c0_i32_0 : i32, i32
  }
  func.func @transform_2(%arg0: i32) -> (i32, i32) {
    %c0_i32 = arith.constant 0 : i32
    %c0_i32_0 = arith.constant 0 : i32
    %c0_i32_1 = arith.constant 0 : i32
    return %c0_i32, %c0_i32_0 : i32, i32
  }
  func.func @transform_3(%arg0: i32) -> (i32, i32) {
    %c0_i32 = arith.constant 0 : i32
    %c0_i32_0 = arith.constant 0 : i32
    %c0_i32_1 = arith.constant 0 : i32
    return %c0_i32, %c0_i32_0 : i32, i32
  }
  func.func @transform_4(%arg0: i32) -> (i32, i32) {
    %c0_i32 = arith.constant 0 : i32
    %c0_i32_0 = arith.constant 0 : i32
    %c0_i32_1 = arith.constant 0 : i32
    return %c0_i32, %c0_i32_0 : i32, i32
  }
  func.func @transform_5(%arg0: i32) -> (i32, i32, i32) {
    %c0_i32 = arith.constant 0 : i32
    %c0_i32_0 = arith.constant 0 : i32
    %c0_i32_1 = arith.constant 0 : i32
    return %arg0, %c0_i32, %c0_i32_0 : i32, i32, i32
  }
}

</mosaic_0001>

<llo_original>
// kernel: tpu_custom_call.1
$region0: #{tpu_custom_call.1}
  #allocation0 [shape = 'u32[]', space=smem, size = 0x4, offset = 0x4, fixed_abs, tag = 'smem constant byte address 0x4 - core index']
  #allocation1 [shape = 'u32[144,128]{1,0:T(1,128)}', space=vmem, size = 0x12000, scoped, tag = 'internal scratch']
  %s0 = inlined_call_operand.vmem [shape: f32[1,8,32], index: 0, kind: input, shape index: {}]
  %s1 = inlined_call_operand.vmem [shape: bf16[32,512], index: 1, kind: input, shape index: {}]
  %s2 = inlined_call_operand.hbm [shape: bf16[512,384], index: 2, kind: input, shape index: {}]
  %s3 = inlined_call_operand.vmem [shape: bf16[384,4], index: 3, kind: input, shape index: {}]
  %s4 = inlined_call_operand.vmem [shape: f32[4,512], index: 4, kind: input, shape index: {}]
  %s5 = inlined_call_operand.vmem [shape: f32[1,8,4], index: 5, kind: output, shape index: {}]
  %s6 = sld [smem:[#allocation0]]
  $region34: #{tpu_custom_call.1} parent=0
    _
  %s8 = ssub.s32 1, %s6
  %s9 = scalar_select 0, %s8, %s6
  $region1: #{tpu_custom_call.1} parent=0
    #allocation2 [shape = 'u8[393216]{0}', space=vmem, size = 0x60000, scoped, tag = 'input window, operand 2, single buffered']
    #allocation3 [shape = 's32[1]{0}', space=sflag, size = 0x4, scoped, tag = 'scoped memory for tpu_custom_call.1']
    %10 = vsyncpa [#allocation3], 0
    // Predicated region
    $region2: #{tpu_custom_call.1} parent=1 // pred_check
      _
    $region3: #{tpu_custom_call.1} parent=1 // pred_check_branch
      %12 = sbr.rel (0) target = $region5
    $region4: #{tpu_custom_call.1} parent=1 // pred_region
      _
    $region5: #{tpu_custom_call.1} parent=1 // pred_fallthru
      _
    // Predicated region
    $region6: #{tpu_custom_call.1} parent=1 // pred_check
      _
    $region7: #{tpu_custom_call.1} parent=1 // pred_check_branch
      %14 = sbr.rel (0) target = $region9
    $region8: #{tpu_custom_call.1} parent=1 // pred_region
      _
    $region9: #{tpu_custom_call.1} parent=1 // pred_fallthru
      _
    // Predicated region
    $region10: #{tpu_custom_call.1} parent=1 // pred_check
      _
    $region11: #{tpu_custom_call.1} parent=1 // pred_check_branch
      %16 = sbr.rel (0) target = $region13
    $region12: #{tpu_custom_call.1} parent=1 // pred_region
      %s18 = ssub.s32 12288, 12288
      %19 = vsyncadd [#allocation3], %s18
      %s20 = sshll.u32 [#allocation2], 4
      %s21 = int_to_ptr.vmem [resolvable:$true] %s20
      %26 = dma.hbm_to_vmem [thread:$0]  %s2, 12288, %s21, [#allocation3], 192, 192, 12
    $region13: #{tpu_custom_call.1} parent=1 // pred_fallthru
      _
    // Predicated region
    $region14: #{tpu_custom_call.1} parent=1 // pred_check
      _
    $region15: #{tpu_custom_call.1} parent=1 // pred_check_branch
      %28 = sbr.rel (0) target = $region17
    $region16: #{tpu_custom_call.1} parent=1 // pred_region
      _
    $region17: #{tpu_custom_call.1} parent=1 // pred_fallthru
      _
    // Predicated region
    $region18: #{tpu_custom_call.1} parent=1 // pred_check
      _
    $region19: #{tpu_custom_call.1} parent=1 // pred_check_branch
      %30 = sbr.rel (0) target = $region21
    $region20: #{tpu_custom_call.1} parent=1 // pred_region
      _
    $region21: #{tpu_custom_call.1} parent=1 // pred_fallthru
      _
    // Predicated region
    $region22: #{tpu_custom_call.1} parent=1 // pred_check
      _
    $region23: #{tpu_custom_call.1} parent=1 // pred_check_branch
      %32 = sbr.rel (0) target = $region25
    $region24: #{tpu_custom_call.1} parent=1 // pred_region
      %33 = dma.done [#allocation3], 12288
    $region25: #{tpu_custom_call.1} parent=1 // pred_fallthru
      _
    %v35 = vld [vmem:[%s4] ss:$4 sm:$0xf]
    %s36 = scalar_lea.vmem %s4, 1
    %v37 = vld [vmem:[%s36] ss:$4 sm:$0xf]
    %s38 = scalar_lea.vmem %s4, 2
    %v39 = vld [vmem:[%s38] ss:$4 sm:$0x7]
    %v40 = vld [vmem:[%s4 + $0x3] sm:$0x1]
    %v41 = vld [vmem:[%s0] sm:$0xff]
    %v42 = vpack.c.bf16 %v41, %v41
    %v43 = vld [vmem:[%s1] sm:$0xff]
    %v44 = vld [vmem:[%s1 + $0x8] sm:$0xff]
    %v45 = vld [vmem:[%s1 + $0x10] sm:$0xff]
    %v46 = vld [vmem:[%s1 + $0x18] sm:$0xff]
    %v47 = vld [vmem:[%s1 + $0x20] sm:$0xff]
    %v48 = vld [vmem:[%s1 + $0x28] sm:$0xff]
    %v49 = vld [vmem:[%s1 + $0x30] sm:$0xff]
    %v50 = vld [vmem:[%s1 + $0x38] sm:$0xff]
    %v59 = vunpack.c.l.b16 %v43
    %v60 = vunpack.c.h.b16 %v43
    %v61 = vunpack.c.l.b16 %v44
    %v62 = vunpack.c.h.b16 %v44
    %v63 = vunpack.c.l.b16 %v45
    %v64 = vunpack.c.h.b16 %v45
    %v65 = vunpack.c.l.b16 %v46
    %v66 = vunpack.c.h.b16 %v46
    %v67 = vunpack.c.l.b16 %v47
    %v68 = vunpack.c.h.b16 %v47
    %v69 = vunpack.c.l.b16 %v48
    %v70 = vunpack.c.h.b16 %v48
    %v71 = vunpack.c.l.b16 %v49
    %v72 = vunpack.c.h.b16 %v49
    %v73 = vunpack.c.l.b16 %v50
    %v74 = vunpack.c.h.b16 %v50
    %v75 = vpack.c.b16 %v63, %v59
    %v76 = vpack.c.b16 %v64, %v60
    %v77 = vpack.c.b16 %v65, %v61
    %v78 = vpack.c.b16 %v66, %v62
    %v79 = vpack.c.b16 %v71, %v67
    %v80 = vpack.c.b16 %v72, %v68
    %v81 = vpack.c.b16 %v73, %v69
    %v82 = vpack.c.b16 %v74, %v70
    %vm91 = vcmask 261120
    %v93 = vsel %vm91, %v42, 0
    %95 = vmatprep.subr.bf16.mxu0 %v76
    %96 = vmatpush1.bf16.msra.mxu0 %v75
    %97 = vmatprep.subr.bf16.mxu0 %v80
    %98 = vmatpush1.bf16.msra.mxu0 %v79
    %99 = vmatprep.subr.bf16.mxu0 0
    %100 = vmatpush1.bf16.msra.mxu0 0
    %101 = vmatprep.subr.bf16.mxu0 0
    %102 = vmatpush1.bf16.msra.mxu0 0
    %103 = vmatprep.subr.bf16.mxu0 0
    %104 = vmatpush1.bf16.msra.mxu0 0
    %105 = vmatprep.subr.bf16.mxu0 0
    %106 = vmatpush1.bf16.msra.mxu0 0
    %107 = vmatprep.subr.bf16.mxu0 0
    %108 = vmatpush1.bf16.msra.mxu0 0
    %109 = vmatprep.subr.bf16.mxu0 0
    %110 = vmatpush1.bf16.msra.mxu0 0
    %111 = vmatprep.subr.bf16.mxu0 0
    %112 = vmatpush1.bf16.msra.mxu0 0
    %113 = vmatprep.subr.bf16.mxu0 0
    %114 = vmatpush1.bf16.msra.mxu0 0
    %115 = vmatprep.subr.bf16.mxu0 0
    %116 = vmatpush1.bf16.msra.mxu0 0
    %117 = vmatprep.subr.bf16.mxu0 0
    %118 = vmatpush1.bf16.msra.mxu0 0
    %119 = vmatprep.subr.bf16.mxu0 0
    %120 = vmatpush1.bf16.msra.mxu0 0
    %121 = vmatprep.subr.bf16.mxu0 0
    %122 = vmatpush1.bf16.msra.mxu0 0
    %123 = vmatprep.subr.bf16.mxu0 0
    %124 = vmatpush1.bf16.msra.mxu0 0
    %125 = vmatprep.subr.bf16.mxu0 0
    %126 = vmatpush1.bf16.msra.mxu0 0
    %127 = vmatprep.mubr.bf16.mxu0 0
    %128 = vmatmul.mubr.bf16.gmra.mrb[0].mxu0 %v93
    %v129 = vpop.f32.mrb[0].mxu0
    %v130 = vadd.f32 0.0, %v129
    %v131 = vpop.f32.mrb[0].mxu0
    %v132 = vadd.f32 0.0, %v131
    %v133 = vpop.f32.mrb[0].mxu0
    %v134 = vpop.f32.mrb[0].mxu0
    %135 = vdwg.mxu0
    %136 = vmatprep.subr.bf16.mxu0 %v78
    %137 = vmatpush1.bf16.msra.mxu0 %v77
    %138 = vmatprep.subr.bf16.mxu0 %v82
    %139 = vmatpush1.bf16.msra.mxu0 %v81
    %140 = vmatprep.subr.bf16.mxu0 0
    %141 = vmatpush1.bf16.msra.mxu0 0
    %142 = vmatprep.subr.bf16.mxu0 0
    %143 = vmatpush1.bf16.msra.mxu0 0
    %144 = vmatprep.subr.bf16.mxu0 0
    %145 = vmatpush1.bf16.msra.mxu0 0
    %146 = vmatprep.subr.bf16.mxu0 0
    %147 = vmatpush1.bf16.msra.mxu0 0
    %148 = vmatprep.subr.bf16.mxu0 0
    %149 = vmatpush1.bf16.msra.mxu0 0
    %150 = vmatprep.subr.bf16.mxu0 0
    %151 = vmatpush1.bf16.msra.mxu0 0
    %152 = vmatprep.subr.bf16.mxu0 0
    %153 = vmatpush1.bf16.msra.mxu0 0
    %154 = vmatprep.subr.bf16.mxu0 0
    %155 = vmatpush1.bf16.msra.mxu0 0
    %156 = vmatprep.subr.bf16.mxu0 0
    %157 = vmatpush1.bf16.msra.mxu0 0
    %158 = vmatprep.subr.bf16.mxu0 0
    %159 = vmatpush1.bf16.msra.mxu0 0
    %160 = vmatprep.subr.bf16.mxu0 0
    %161 = vmatpush1.bf16.msra.mxu0 0
    %162 = vmatprep.subr.bf16.mxu0 0
    %163 = vmatpush1.bf16.msra.mxu0 0
    %164 = vmatprep.subr.bf16.mxu0 0
    %165 = vmatpush1.bf16.msra.mxu0 0
    %166 = vmatprep.subr.bf16.mxu0 0
    %167 = vmatpush1.bf16.msra.mxu0 0
    %168 = vmatprep.mubr.bf16.mxu0 0
    %169 = vmatmul.mubr.bf16.gmra.mrb[0].mxu0 %v93
    %v170 = vpop.f32.mrb[0].mxu0
    %v171 = vadd.f32 0.0, %v170
    %v172 = vpop.f32.mrb[0].mxu0
    %v173 = vadd.f32 0.0, %v172
    %v174 = vpop.f32.mrb[0].mxu0
    %v175 = vpop.f32.mrb[0].mxu0
    %176 = vdwg.mxu0
    %v177 = vrot.slane %v130, 4
    %v178 = vadd.f32 %v130, %v177
    %v179 = vrot.slane %v178, 2
    %v180 = vadd.f32 %v178, %v179
    %v181 = vrot.slane %v180, 1
    %v182 = vadd.f32 %v180, %v181
    %v183 = vrot.slane %v132, 4
    %v184 = vadd.f32 %v132, %v183
    %v185 = vrot.slane %v184, 2
    %v186 = vadd.f32 %v184, %v185
    %v187 = vrot.slane %v186, 1
    %v188 = vadd.f32 %v186, %v187
    %v189 = vrot.slane %v171, 4
    %v190 = vadd.f32 %v171, %v189
    %v191 = vrot.slane %v190, 2
    %v192 = vadd.f32 %v190, %v191
    %v193 = vrot.slane %v192, 1
    %v194 = vadd.f32 %v192, %v193
    %v195 = vrot.slane %v173, 4
    %v196 = vadd.f32 %v173, %v195
    %v197 = vrot.slane %v196, 2
    %v198 = vadd.f32 %v196, %v197
    %v199 = vrot.slane %v198, 1
    %v200 = vadd.f32 %v198, %v199
    %v201 = vrcp.pop 8.0
    %v202 = vmul.f32 %v182, %v201
    %v203 = vmul.f32 %v188, %v201
    %v204 = vmul.f32 %v194, %v201
    %v205 = vmul.f32 %v200, %v201
    %v206 = vsub.f32 %v130, %v202
    %v207 = vsub.f32 %v132, %v203
    %v208 = vsub.f32 %v171, %v204
    %v209 = vsub.f32 %v173, %v205
    %v210 = vmul.f32 %v206, %v206
    %v211 = vmul.f32 %v207, %v207
    %v212 = vmul.f32 %v208, %v208
    %v213 = vmul.f32 %v209, %v209
    %v214 = vrot.slane %v210, 4
    %v215 = vadd.f32 %v210, %v214
    %v216 = vrot.slane %v215, 2
    %v217 = vadd.f32 %v215, %v216
    %v218 = vrot.slane %v217, 1
    %v219 = vadd.f32 %v217, %v218
    %v220 = vrot.slane %v211, 4
    %v221 = vadd.f32 %v211, %v220
    %v222 = vrot.slane %v221, 2
    %v223 = vadd.f32 %v221, %v222
    %v224 = vrot.slane %v223, 1
    %v225 = vadd.f32 %v223, %v224
    %v226 = vrot.slane %v212, 4
    %v227 = vadd.f32 %v212, %v226
    %v228 = vrot.slane %v227, 2
    %v229 = vadd.f32 %v227, %v228
    %v230 = vrot.slane %v229, 1
    %v231 = vadd.f32 %v229, %v230
    %v232 = vrot.slane %v213, 4
    %v233 = vadd.f32 %v213, %v232
    %v234 = vrot.slane %v233, 2
    %v235 = vadd.f32 %v233, %v234
    %v236 = vrot.slane %v235, 1
    %v237 = vadd.f32 %v235, %v236
    %v238 = vmul.f32 %v219, %v201
    %v239 = vmul.f32 %v225, %v201
    %v240 = vmul.f32 %v231, %v201
    %v241 = vmul.f32 %v237, %v201
    %v242 = vadd.f32 %v238, 1e-05
    %v243 = vadd.f32 %v239, 1e-05
    %v244 = vadd.f32 %v240, 1e-05
    %v245 = vadd.f32 %v241, 1e-05
    %v246 = vrsqrt.pop %v242
    %v247 = vrsqrt.pop %v243
    %v248 = vrsqrt.pop %v244
    %v249 = vrsqrt.pop %v245
    %v254 = vcombine.low %v246, %v247
    %v255 = vcombine.low %v248, %v249
    %v257 = vunpack.c.l.s4 1966171168
    %v258 = vunpack.c.0.s8 %v257
    %v259 = vlaneseq
    %v260 = vshrl.u32 %v259, 7
    %v261 = vsub.s32 %v258, %v260
    %v262 = vrot.slane %v254, %v261
    %v264 = vunpack.c.l.s4 1966171168
    %v265 = vunpack.c.0.s8 %v264
    %v266 = vlaneseq
    %v267 = vshrl.u32 %v266, 7
    %v268 = vsub.s32 %v265, %v267
    %v269 = vrot.slane %v255, %v268
    %v270 = vcombine.low %v262, %v269
    %v272 = vunpack.c.l.s4 1966171168
    %v273 = vunpack.c.0.s8 %v272
    %v274 = vlaneseq
    %v275 = vshrl.u32 %v274, 7
    %v276 = vsub.s32 %v273, %v275
    %v277 = vrot.slane %v270, %v276
    %v279 = vmul.f32 %v35, %v277
    %v281 = vlaneseq
    %v282 = vshrl.u32 %v281, 7
    %v283 = vsub.s32 0, %v282
    %v284 = vrot.slane %v279, %v283
    %v285 = vlaneseq
    %v286 = vshrl.u32 %v285, 7
    %v287 = vsub.s32 1, %v286
    %v288 = vrot.slane %v279, %v287
    %v289 = vlaneseq
    %v290 = vshrl.u32 %v289, 7
    %v291 = vsub.s32 2, %v290
    %v292 = vrot.slane %v279, %v291
    %v293 = vlaneseq
    %v294 = vshrl.u32 %v293, 7
    %v295 = vsub.s32 3, %v294
    %v296 = vrot.slane %v279, %v295
    %v301 = vmul.f32 %v202, %v284
    %v302 = vmul.f32 %v203, %v288
    %v303 = vmul.f32 %v204, %v292
    %v304 = vmul.f32 %v205, %v296
    %v309 = vcombine.low %v301, %v302
    %v310 = vcombine.low %v303, %v304
    %v312 = vunpack.c.l.s4 1966171168
    %v313 = vunpack.c.0.s8 %v312
    %v314 = vlaneseq
    %v315 = vshrl.u32 %v314, 7
    %v316 = vsub.s32 %v313, %v315
    %v317 = vrot.slane %v309, %v316
    %v319 = vunpack.c.l.s4 1966171168
    %v320 = vunpack.c.0.s8 %v319
    %v321 = vlaneseq
    %v322 = vshrl.u32 %v321, 7
    %v323 = vsub.s32 %v320, %v322
    %v324 = vrot.slane %v310, %v323
    %v325 = vcombine.low %v317, %v324
    %v327 = vunpack.c.l.s4 1966171168
    %v328 = vunpack.c.0.s8 %v327
    %v329 = vlaneseq
    %v330 = vshrl.u32 %v329, 7
    %v331 = vsub.s32 %v328, %v330
    %v332 = vrot.slane %v325, %v331
    %v334 = vsub.f32 %v37, %v332
    %v335 = vmul.f32 %v130, %v284
    %v336 = vmul.f32 %v132, %v288
    %v337 = vmul.f32 %v171, %v292
    %v338 = vmul.f32 %v173, %v296
    %v340 = vlaneseq
    %v341 = vshrl.u32 %v340, 7
    %v342 = vsub.s32 0, %v341
    %v343 = vrot.slane %v334, %v342
    %v344 = vlaneseq
    %v345 = vshrl.u32 %v344, 7
    %v346 = vsub.s32 1, %v345
    %v347 = vrot.slane %v334, %v346
    %v348 = vlaneseq
    %v349 = vshrl.u32 %v348, 7
    %v350 = vsub.s32 2, %v349
    %v351 = vrot.slane %v334, %v350
    %v352 = vlaneseq
    %v353 = vshrl.u32 %v352, 7
    %v354 = vsub.s32 3, %v353
    %v355 = vrot.slane %v334, %v354
    %v360 = vadd.f32 %v335, %v343
    %v361 = vadd.f32 %v336, %v347
    %v362 = vadd.f32 %v337, %v351
    %v363 = vadd.f32 %v338, %v355
    %v364 = vmax.f32 %v360, 0.0
    %v365 = vmax.f32 %v361, 0.0
    %v366 = vmax.f32 %v362, 0.0
    %v367 = vmax.f32 %v363, 0.0
    %v368 = vpack.c.bf16 %v364, %v364
    %v369 = vpack.c.bf16 %v365, %v365
    %v370 = vpack.c.bf16 %v366, %v366
    %v371 = vpack.c.bf16 %v367, %v367
    %v372 = vld [vmem:[#allocation2] sm:$0xff]
    %v373 = vld [vmem:[#allocation2 + $0x8] sm:$0xf]
    %v374 = vld [vmem:[#allocation2 + $0xc] sm:$0xff]
    %v375 = vld [vmem:[#allocation2 + $0x14] sm:$0xf]
    %v376 = vld [vmem:[#allocation2 + $0x18] sm:$0xff]
    %v377 = vld [vmem:[#allocation2 + $0x20] sm:$0xf]
    %v378 = vld [vmem:[#allocation2 + $0x24] sm:$0xff]
    %v379 = vld [vmem:[#allocation2 + $0x2c] sm:$0xf]
    %v380 = vld [vmem:[#allocation2 + $0x30] sm:$0xff]
    %v381 = vld [vmem:[#allocation2 + $0x38] sm:$0xf]
    %v382 = vld [vmem:[#allocation2 + $0x3c] sm:$0xff]
    %v383 = vld [vmem:[#allocation2 + $0x44] sm:$0xf]
    %v384 = vld [vmem:[#allocation2 + $0x48] sm:$0xff]
    %v385 = vld [vmem:[#allocation2 + $0x50] sm:$0xf]
    %v386 = vld [vmem:[#allocation2 + $0x54] sm:$0xff]
    %v387 = vld [vmem:[#allocation2 + $0x5c] sm:$0xf]
    %v388 = vld [vmem:[#allocation2 + $0x60] sm:$0xff]
    %v389 = vld [vmem:[#allocation2 + $0x68] sm:$0xf]
    %v390 = vld [vmem:[#allocation2 + $0x6c] sm:$0xff]
    %v391 = vld [vmem:[#allocation2 + $0x74] sm:$0xf]
    %v392 = vld [vmem:[#allocation2 + $0x78] sm:$0xff]
    %v393 = vld [vmem:[#allocation2 + $0x80] sm:$0xf]
    %v394 = vld [vmem:[#allocation2 + $0x84] sm:$0xff]
    %v395 = vld [vmem:[#allocation2 + $0x8c] sm:$0xf]
    %v396 = vld [vmem:[#allocation2 + $0x90] sm:$0xff]
    %v397 = vld [vmem:[#allocation2 + $0x98] sm:$0xf]
    %v398 = vld [vmem:[#allocation2 + $0x9c] sm:$0xff]
    %v399 = vld [vmem:[#allocation2 + $0xa4] sm:$0xf]
    %v400 = vld [vmem:[#allocation2 + $0xa8] sm:$0xff]
    %v401 = vld [vmem:[#allocation2 + $0xb0] sm:$0xf]
    %v402 = vld [vmem:[#allocation2 + $0xb4] sm:$0xff]
    %v403 = vld [vmem:[#allocation2 + $0xbc] sm:$0xf]
    %v404 = vld [vmem:[#allocation2 + $0xc0] sm:$0xff]
    %v405 = vld [vmem:[#allocation2 + $0xc8] sm:$0xf]
    %v406 = vld [vmem:[#allocation2 + $0xcc] sm:$0xff]
    %v407 = vld [vmem:[#allocation2 + $0xd4] sm:$0xf]
    %v408 = vld [vmem:[#allocation2 + $0xd8] sm:$0xff]
    %v409 = vld [vmem:[#allocation2 + $0xe0] sm:$0xf]
    %v410 = vld [vmem:[#allocation2 + $0xe4] sm:$0xff]
    %v411 = vld [vmem:[#allocation2 + $0xec] sm:$0xf]
    %v412 = vld [vmem:[#allocation2 + $0xf0] sm:$0xff]
    %v413 = vld [vmem:[#allocation2 + $0xf8] sm:$0xf]
    %v414 = vld [vmem:[#allocation2 + $0xfc] sm:$0xff]
    %v415 = vld [vmem:[#allocation2 + $0x104] sm:$0xf]
    %v416 = vld [vmem:[#allocation2 + $0x108] sm:$0xff]
    %v417 = vld [vmem:[#allocation2 + $0x110] sm:$0xf]
    %v418 = vld [vmem:[#allocation2 + $0x114] sm:$0xff]
    %v419 = vld [vmem:[#allocation2 + $0x11c] sm:$0xf]
    %v420 = vld [vmem:[#allocation2 + $0x120] sm:$0xff]
    %v421 = vld [vmem:[#allocation2 + $0x128] sm:$0xf]
    %v422 = vld [vmem:[#allocation2 + $0x12c] sm:$0xff]
    %v423 = vld [vmem:[#allocation2 + $0x134] sm:$0xf]
    %v424 = vld [vmem:[#allocation2 + $0x138] sm:$0xff]
    %v425 = vld [vmem:[#allocation2 + $0x140] sm:$0xf]
    %v426 = vld [vmem:[#allocation2 + $0x144] sm:$0xff]
    %v427 = vld [vmem:[#allocation2 + $0x14c] sm:$0xf]
    %v428 = vld [vmem:[#allocation2 + $0x150] sm:$0xff]
    %v429 = vld [vmem:[#allocation2 + $0x158] sm:$0xf]
    %v430 = vld [vmem:[#allocation2 + $0x15c] sm:$0xff]
    %v431 = vld [vmem:[#allocation2 + $0x164] sm:$0xf]
    %v432 = vld [vmem:[#allocation2 + $0x168] sm:$0xff]
    %v433 = vld [vmem:[#allocation2 + $0x170] sm:$0xf]
    %v434 = vld [vmem:[#allocation2 + $0x174] sm:$0xff]
    %v435 = vld [vmem:[#allocation2 + $0x17c] sm:$0xf]
    %v436 = vld [vmem:[#allocation2 + $0x180] sm:$0xff]
    %v437 = vld [vmem:[#allocation2 + $0x188] sm:$0xf]
    %v438 = vld [vmem:[#allocation2 + $0x18c] sm:$0xff]
    %v439 = vld [vmem:[#allocation2 + $0x194] sm:$0xf]
    %v440 = vld [vmem:[#allocation2 + $0x198] sm:$0xff]
    %v441 = vld [vmem:[#allocation2 + $0x1a0] sm:$0xf]
    %v442 = vld [vmem:[#allocation2 + $0x1a4] sm:$0xff]
    %v443 = vld [vmem:[#allocation2 + $0x1ac] sm:$0xf]
    %v444 = vld [vmem:[#allocation2 + $0x1b0] sm:$0xff]
    %v445 = vld [vmem:[#allocation2 + $0x1b8] sm:$0xf]
    %v446 = vld [vmem:[#allocation2 + $0x1bc] sm:$0xff]
    %v447 = vld [vmem:[#allocation2 + $0x1c4] sm:$0xf]
    %v448 = vld [vmem:[#allocation2 + $0x1c8] sm:$0xff]
    %v449 = vld [vmem:[#allocation2 + $0x1d0] sm:$0xf]
    %v450 = vld [vmem:[#allocation2 + $0x1d4] sm:$0xff]
    %v451 = vld [vmem:[#allocation2 + $0x1dc] sm:$0xf]
    %v452 = vld [vmem:[#allocation2 + $0x1e0] sm:$0xff]
    %v453 = vld [vmem:[#allocation2 + $0x1e8] sm:$0xf]
    %v454 = vld [vmem:[#allocation2 + $0x1ec] sm:$0xff]
    %v455 = vld [vmem:[#allocation2 + $0x1f4] sm:$0xf]
    %v456 = vld [vmem:[#allocation2 + $0x1f8] sm:$0xff]
    %v457 = vld [vmem:[#allocation2 + $0x200] sm:$0xf]
    %v458 = vld [vmem:[#allocation2 + $0x204] sm:$0xff]
    %v459 = vld [vmem:[#allocation2 + $0x20c] sm:$0xf]
    %v460 = vld [vmem:[#allocation2 + $0x210] sm:$0xff]
    %v461 = vld [vmem:[#allocation2 + $0x218] sm:$0xf]
    %v462 = vld [vmem:[#allocation2 + $0x21c] sm:$0xff]
    %v463 = vld [vmem:[#allocation2 + $0x224] sm:$0xf]
    %v464 = vld [vmem:[#allocation2 + $0x228] sm:$0xff]
    %v465 = vld [vmem:[#allocation2 + $0x230] sm:$0xf]
    %v466 = vld [vmem:[#allocation2 + $0x234] sm:$0xff]
    %v467 = vld [vmem:[#allocation2 + $0x23c] sm:$0xf]
    %v468 = vld [vmem:[#allocation2 + $0x240] sm:$0xff]
    %v469 = vld [vmem:[#allocation2 + $0x248] sm:$0xf]
    %v470 = vld [vmem:[#allocation2 + $0x24c] sm:$0xff]
    %v471 = vld [vmem:[#allocation2 + $0x254] sm:$0xf]
    %v472 = vld [vmem:[#allocation2 + $0x258] sm:$0xff]
    %v473 = vld [vmem:[#allocation2 + $0x260] sm:$0xf]
    %v474 = vld [vmem:[#allocation2 + $0x264] sm:$0xff]
    %v475 = vld [vmem:[#allocation2 + $0x26c] sm:$0xf]
    %v476 = vld [vmem:[#allocation2 + $0x270] sm:$0xff]
    %v477 = vld [vmem:[#allocation2 + $0x278] sm:$0xf]
    %v478 = vld [vmem:[#allocation2 + $0x27c] sm:$0xff]
    %v479 = vld [vmem:[#allocation2 + $0x284] sm:$0xf]
    %v480 = vld [vmem:[#allocation2 + $0x288] sm:$0xff]
    %v481 = vld [vmem:[#allocation2 + $0x290] sm:$0xf]
    %v482 = vld [vmem:[#allocation2 + $0x294] sm:$0xff]
    %v483 = vld [vmem:[#allocation2 + $0x29c] sm:$0xf]
    %v484 = vld [vmem:[#allocation2 + $0x2a0] sm:$0xff]
    %v485 = vld [vmem:[#allocation2 + $0x2a8] sm:$0xf]
    %v486 = vld [vmem:[#allocation2 + $0x2ac] sm:$0xff]
    %v487 = vld [vmem:[#allocation2 + $0x2b4] sm:$0xf]
    %v488 = vld [vmem:[#allocation2 + $0x2b8] sm:$0xff]
    %v489 = vld [vmem:[#allocation2 + $0x2c0] sm:$0xf]
    %v490 = vld [vmem:[#allocation2 + $0x2c4] sm:$0xff]
    %v491 = vld [vmem:[#allocation2 + $0x2cc] sm:$0xf]
    %v492 = vld [vmem:[#allocation2 + $0x2d0] sm:$0xff]
    %v493 = vld [vmem:[#allocation2 + $0x2d8] sm:$0xf]
    %v494 = vld [vmem:[#allocation2 + $0x2dc] sm:$0xff]
    %v495 = vld [vmem:[#allocation2 + $0x2e4] sm:$0xf]
    %v496 = vld [vmem:[#allocation2 + $0x2e8] sm:$0xff]
    %v497 = vld [vmem:[#allocation2 + $0x2f0] sm:$0xf]
    %v498 = vld [vmem:[#allocation2 + $0x2f4] sm:$0xff]
    %v499 = vld [vmem:[#allocation2 + $0x2fc] sm:$0xf]
    %v501 = vlaneseq
    %v502 = vshrl.u32 %v501, 7
    %v503 = vsub.s32 0, %v502
    %v504 = vrot.slane %v39, %v503
    %v505 = vlaneseq
    %v506 = vshrl.u32 %v505, 7
    %v507 = vsub.s32 1, %v506
    %v508 = vrot.slane %v39, %v507
    %v509 = vlaneseq
    %v510 = vshrl.u32 %v509, 7
    %v511 = vsub.s32 2, %v510
    %v512 = vrot.slane %v39, %v511
    %v644 = vunpack.c.l.b16 %v372
    %v645 = vunpack.c.h.b16 %v372
    %v646 = vunpack.c.l.b16 %v373
    %v647 = vunpack.c.l.b16 %v374
    %v648 = vunpack.c.h.b16 %v374
    %v649 = vunpack.c.l.b16 %v375
    %v650 = vunpack.c.l.b16 %v376
    %v651 = vunpack.c.h.b16 %v376
    %v652 = vunpack.c.l.b16 %v377
    %v653 = vunpack.c.l.b16 %v378
    %v654 = vunpack.c.h.b16 %v378
    %v655 = vunpack.c.l.b16 %v379
    %v656 = vunpack.c.l.b16 %v380
    %v657 = vunpack.c.h.b16 %v380
    %v658 = vunpack.c.l.b16 %v381
    %v659 = vunpack.c.l.b16 %v382
    %v660 = vunpack.c.h.b16 %v382
    %v661 = vunpack.c.l.b16 %v383
    %v662 = vunpack.c.l.b16 %v384
    %v663 = vunpack.c.h.b16 %v384
    %v664 = vunpack.c.l.b16 %v385
    %v665 = vunpack.c.l.b16 %v386
    %v666 = vunpack.c.h.b16 %v386
    %v667 = vunpack.c.l.b16 %v387
    %v668 = vunpack.c.l.b16 %v388
    %v669 = vunpack.c.h.b16 %v388
    %v670 = vunpack.c.l.b16 %v389
    %v671 = vunpack.c.l.b16 %v390
    %v672 = vunpack.c.h.b16 %v390
    %v673 = vunpack.c.l.b16 %v391
    %v674 = vunpack.c.l.b16 %v392
    %v675 = vunpack.c.h.b16 %v392
    %v676 = vunpack.c.l.b16 %v393
    %v677 = vunpack.c.l.b16 %v394
    %v678 = vunpack.c.h.b16 %v394
    %v679 = vunpack.c.l.b16 %v395
    %v680 = vunpack.c.l.b16 %v396
    %v681 = vunpack.c.h.b16 %v396
    %v682 = vunpack.c.l.b16 %v397
    %v683 = vunpack.c.l.b16 %v398
    %v684 = vunpack.c.h.b16 %v398
    %v685 = vunpack.c.l.b16 %v399
    %v686 = vunpack.c.l.b16 %v400
    %v687 = vunpack.c.h.b16 %v400
    %v688 = vunpack.c.l.b16 %v401
    %v689 = vunpack.c.l.b16 %v402
    %v690 = vunpack.c.h.b16 %v402
    %v691 = vunpack.c.l.b16 %v403
    %v692 = vunpack.c.l.b16 %v404
    %v693 = vunpack.c.h.b16 %v404
    %v694 = vunpack.c.l.b16 %v405
    %v695 = vunpack.c.l.b16 %v406
    %v696 = vunpack.c.h.b16 %v406
    %v697 = vunpack.c.l.b16 %v407
    %v698 = vunpack.c.l.b16 %v408
    %v699 = vunpack.c.h.b16 %v408
    %v700 = vunpack.c.l.b16 %v409
    %v701 = vunpack.c.l.b16 %v410
    %v702 = vunpack.c.h.b16 %v410
    %v703 = vunpack.c.l.b16 %v411
    %v704 = vunpack.c.l.b16 %v412
    %v705 = vunpack.c.h.b16 %v412
    %v706 = vunpack.c.l.b16 %v413
    %v707 = vunpack.c.l.b16 %v414
    %v708 = vunpack.c.h.b16 %v414
    %v709 = vunpack.c.l.b16 %v415
    %v710 = vunpack.c.l.b16 %v416
    %v711 = vunpack.c.h.b16 %v416
    %v712 = vunpack.c.l.b16 %v417
    %v713 = vunpack.c.l.b16 %v418
    %v714 = vunpack.c.h.b16 %v418
    %v715 = vunpack.c.l.b16 %v419
    %v716 = vunpack.c.l.b16 %v420
    %v717 = vunpack.c.h.b16 %v420
    %v718 = vunpack.c.l.b16 %v421
    %v719 = vunpack.c.l.b16 %v422
    %v720 = vunpack.c.h.b16 %v422
    %v721 = vunpack.c.l.b16 %v423
    %v722 = vunpack.c.l.b16 %v424
    %v723 = vunpack.c.h.b16 %v424
    %v724 = vunpack.c.l.b16 %v425
    %v725 = vunpack.c.l.b16 %v426
    %v726 = vunpack.c.h.b16 %v426
    %v727 = vunpack.c.l.b16 %v427
    %v728 = vunpack.c.l.b16 %v428
    %v729 = vunpack.c.h.b16 %v428
    %v730 = vunpack.c.l.b16 %v429
    %v731 = vunpack.c.l.b16 %v430
    %v732 = vunpack.c.h.b16 %v430
    %v733 = vunpack.c.l.b16 %v431
    %v734 = vunpack.c.l.b16 %v432
    %v735 = vunpack.c.h.b16 %v432
    %v736 = vunpack.c.l.b16 %v433
    %v737 = vunpack.c.l.b16 %v434
    %v738 = vunpack.c.h.b16 %v434
    %v739 = vunpack.c.l.b16 %v435
    %v740 = vunpack.c.l.b16 %v436
    %v741 = vunpack.c.h.b16 %v436
    %v742 = vunpack.c.l.b16 %v437
    %v743 = vunpack.c.l.b16 %v438
    %v744 = vunpack.c.h.b16 %v438
    %v745 = vunpack.c.l.b16 %v439
    %v746 = vunpack.c.l.b16 %v440
    %v747 = vunpack.c.h.b16 %v440
    %v748 = vunpack.c.l.b16 %v441
    %v749 = vunpack.c.l.b16 %v442
    %v750 = vunpack.c.h.b16 %v442
    %v751 = vunpack.c.l.b16 %v443
    %v752 = vunpack.c.l.b16 %v444
    %v753 = vunpack.c.h.b16 %v444
    %v754 = vunpack.c.l.b16 %v445
    %v755 = vunpack.c.l.b16 %v446
    %v756 = vunpack.c.h.b16 %v446
    %v757 = vunpack.c.l.b16 %v447
    %v758 = vunpack.c.l.b16 %v448
    %v759 = vunpack.c.h.b16 %v448
    %v760 = vunpack.c.l.b16 %v449
    %v761 = vunpack.c.l.b16 %v450
    %v762 = vunpack.c.h.b16 %v450
    %v763 = vunpack.c.l.b16 %v451
    %v764 = vunpack.c.l.b16 %v452
    %v765 = vunpack.c.h.b16 %v452
    %v766 = vunpack.c.l.b16 %v453
    %v767 = vunpack.c.l.b16 %v454
    %v768 = vunpack.c.h.b16 %v454
    %v769 = vunpack.c.l.b16 %v455
    %v770 = vunpack.c.l.b16 %v456
    %v771 = vunpack.c.h.b16 %v456
    %v772 = vunpack.c.l.b16 %v457
    %v773 = vunpack.c.l.b16 %v458
    %v774 = vunpack.c.h.b16 %v458
    %v775 = vunpack.c.l.b16 %v459
    %v776 = vunpack.c.l.b16 %v460
    %v777 = vunpack.c.h.b16 %v460
    %v778 = vunpack.c.l.b16 %v461
    %v779 = vunpack.c.l.b16 %v462
    %v780 = vunpack.c.h.b16 %v462
    %v781 = vunpack.c.l.b16 %v463
    %v782 = vunpack.c.l.b16 %v464
    %v783 = vunpack.c.h.b16 %v464
    %v784 = vunpack.c.l.b16 %v465
    %v785 = vunpack.c.l.b16 %v466
    %v786 = vunpack.c.h.b16 %v466
    %v787 = vunpack.c.l.b16 %v467
    %v788 = vunpack.c.l.b16 %v468
    %v789 = vunpack.c.h.b16 %v468
    %v790 = vunpack.c.l.b16 %v469
    %v791 = vunpack.c.l.b16 %v470
    %v792 = vunpack.c.h.b16 %v470
    %v793 = vunpack.c.l.b16 %v471
    %v794 = vunpack.c.l.b16 %v472
    %v795 = vunpack.c.h.b16 %v472
    %v796 = vunpack.c.l.b16 %v473
    %v797 = vunpack.c.l.b16 %v474
    %v798 = vunpack.c.h.b16 %v474
    %v799 = vunpack.c.l.b16 %v475
    %v800 = vunpack.c.l.b16 %v476
    %v801 = vunpack.c.h.b16 %v476
    %v802 = vunpack.c.l.b16 %v477
    %v803 = vunpack.c.l.b16 %v478
    %v804 = vunpack.c.h.b16 %v478
    %v805 = vunpack.c.l.b16 %v479
    %v806 = vunpack.c.l.b16 %v480
    %v807 = vunpack.c.h.b16 %v480
    %v808 = vunpack.c.l.b16 %v481
    %v809 = vunpack.c.l.b16 %v482
    %v810 = vunpack.c.h.b16 %v482
    %v811 = vunpack.c.l.b16 %v483
    %v812 = vunpack.c.l.b16 %v484
    %v813 = vunpack.c.h.b16 %v484
    %v814 = vunpack.c.l.b16 %v485
    %v815 = vunpack.c.l.b16 %v486
    %v816 = vunpack.c.h.b16 %v486
    %v817 = vunpack.c.l.b16 %v487
    %v818 = vunpack.c.l.b16 %v488
    %v819 = vunpack.c.h.b16 %v488
    %v820 = vunpack.c.l.b16 %v489
    %v821 = vunpack.c.l.b16 %v490
    %v822 = vunpack.c.h.b16 %v490
    %v823 = vunpack.c.l.b16 %v491
    %v824 = vunpack.c.l.b16 %v492
    %v825 = vunpack.c.h.b16 %v492
    %v826 = vunpack.c.l.b16 %v493
    %v827 = vunpack.c.l.b16 %v494
    %v828 = vunpack.c.h.b16 %v494
    %v829 = vunpack.c.l.b16 %v495
    %v830 = vunpack.c.l.b16 %v496
    %v831 = vunpack.c.h.b16 %v496
    %v832 = vunpack.c.l.b16 %v497
    %v833 = vunpack.c.l.b16 %v498
    %v834 = vunpack.c.h.b16 %v498
    %v835 = vunpack.c.l.b16 %v499
    %v836 = vpack.c.b16 %v647, %v644
    %v837 = vpack.c.b16 %v648, %v645
    %v838 = vpack.c.b16 %v649, %v646
    %v839 = vpack.c.b16 %v653, %v650
    %v840 = vpack.c.b16 %v654, %v651
    %v841 = vpack.c.b16 %v655, %v652
    %v842 = vpack.c.b16 %v659, %v656
    %v843 = vpack.c.b16 %v660, %v657
    %v844 = vpack.c.b16 %v661, %v658
    %v845 = vpack.c.b16 %v665, %v662
    %v846 = vpack.c.b16 %v666, %v663
    %v847 = vpack.c.b16 %v667, %v664
    %v848 = vpack.c.b16 %v671, %v668
    %v849 = vpack.c.b16 %v672, %v669
    %v850 = vpack.c.b16 %v673, %v670
    %v851 = vpack.c.b16 %v677, %v674
    %v852 = vpack.c.b16 %v678, %v675
    %v853 = vpack.c.b16 %v679, %v676
    %v854 = vpack.c.b16 %v683, %v680
    %v855 = vpack.c.b16 %v684, %v681
    %v856 = vpack.c.b16 %v685, %v682
    %v857 = vpack.c.b16 %v689, %v686
    %v858 = vpack.c.b16 %v690, %v687
    %v859 = vpack.c.b16 %v691, %v688
    %v860 = vpack.c.b16 %v695, %v692
    %v861 = vpack.c.b16 %v696, %v693
    %v862 = vpack.c.b16 %v697, %v694
    %v863 = vpack.c.b16 %v701, %v698
    %v864 = vpack.c.b16 %v702, %v699
    %v865 = vpack.c.b16 %v703, %v700
    %v866 = vpack.c.b16 %v707, %v704
    %v867 = vpack.c.b16 %v708, %v705
    %v868 = vpack.c.b16 %v709, %v706
    %v869 = vpack.c.b16 %v713, %v710
    %v870 = vpack.c.b16 %v714, %v711
    %v871 = vpack.c.b16 %v715, %v712
    %v872 = vpack.c.b16 %v719, %v716
    %v873 = vpack.c.b16 %v720, %v717
    %v874 = vpack.c.b16 %v721, %v718
    %v875 = vpack.c.b16 %v725, %v722
    %v876 = vpack.c.b16 %v726, %v723
    %v877 = vpack.c.b16 %v727, %v724
    %v878 = vpack.c.b16 %v731, %v728
    %v879 = vpack.c.b16 %v732, %v729
    %v880 = vpack.c.b16 %v733, %v730
    %v881 = vpack.c.b16 %v737, %v734
    %v882 = vpack.c.b16 %v738, %v735
    %v883 = vpack.c.b16 %v739, %v736
    %v884 = vpack.c.b16 %v743, %v740
    %v885 = vpack.c.b16 %v744, %v741
    %v886 = vpack.c.b16 %v745, %v742
    %v887 = vpack.c.b16 %v749, %v746
    %v888 = vpack.c.b16 %v750, %v747
    %v889 = vpack.c.b16 %v751, %v748
    %v890 = vpack.c.b16 %v755, %v752
    %v891 = vpack.c.b16 %v756, %v753
    %v892 = vpack.c.b16 %v757, %v754
    %v893 = vpack.c.b16 %v761, %v758
    %v894 = vpack.c.b16 %v762, %v759
    %v895 = vpack.c.b16 %v763, %v760
    %v896 = vpack.c.b16 %v767, %v764
    %v897 = vpack.c.b16 %v768, %v765
    %v898 = vpack.c.b16 %v769, %v766
    %v899 = vpack.c.b16 %v773, %v770
    %v900 = vpack.c.b16 %v774, %v771
    %v901 = vpack.c.b16 %v775, %v772
    %v902 = vpack.c.b16 %v779, %v776
    %v903 = vpack.c.b16 %v780, %v777
    %v904 = vpack.c.b16 %v781, %v778
    %v905 = vpack.c.b16 %v785, %v782
    %v906 = vpack.c.b16 %v786, %v783
    %v907 = vpack.c.b16 %v787, %v784
    %v908 = vpack.c.b16 %v791, %v788
    %v909 = vpack.c.b16 %v792, %v789
    %v910 = vpack.c.b16 %v793, %v790
    %v911 = vpack.c.b16 %v797, %v794
    %v912 = vpack.c.b16 %v798, %v795
    %v913 = vpack.c.b16 %v799, %v796
    %v914 = vpack.c.b16 %v803, %v800
    %v915 = vpack.c.b16 %v804, %v801
    %v916 = vpack.c.b16 %v805, %v802
    %v917 = vpack.c.b16 %v809, %v806
    %v918 = vpack.c.b16 %v810, %v807
    %v919 = vpack.c.b16 %v811, %v808
    %v920 = vpack.c.b16 %v815, %v812
    %v921 = vpack.c.b16 %v816, %v813
    %v922 = vpack.c.b16 %v817, %v814
    %v923 = vpack.c.b16 %v821, %v818
    %v924 = vpack.c.b16 %v822, %v819
    %v925 = vpack.c.b16 %v823, %v820
    %v926 = vpack.c.b16 %v827, %v824
    %v927 = vpack.c.b16 %v828, %v825
    %v928 = vpack.c.b16 %v829, %v826
    %v929 = vpack.c.b16 %v833, %v830
    %v930 = vpack.c.b16 %v834, %v831
    %v931 = vpack.c.b16 %v835, %v832
    %1028 = vmatprep.subr.bf16.mxu0 %v837
    %1029 = vmatpush1.bf16.msra.mxu0 %v836
    %1030 = vmatprep.subr.bf16.mxu0 %v840
    %1031 = vmatpush1.bf16.msra.mxu0 %v839
    %1032 = vmatprep.subr.bf16.mxu0 %v843
    %1033 = vmatpush1.bf16.msra.mxu0 %v842
    %1034 = vmatprep.subr.bf16.mxu0 %v846
    %1035 = vmatpush1.bf16.msra.mxu0 %v845
    %1036 = vmatprep.subr.bf16.mxu0 %v849
    %1037 = vmatpush1.bf16.msra.mxu0 %v848
    %1038 = vmatprep.subr.bf16.mxu0 %v852
    %1039 = vmatpush1.bf16.msra.mxu0 %v851
    %1040 = vmatprep.subr.bf16.mxu0 %v855
    %1041 = vmatpush1.bf16.msra.mxu0 %v854
    %1042 = vmatprep.subr.bf16.mxu0 %v858
    %1043 = vmatpush1.bf16.msra.mxu0 %v857
    %1044 = vmatprep.subr.bf16.mxu0 %v861
    %1045 = vmatpush1.bf16.msra.mxu0 %v860
    %1046 = vmatprep.subr.bf16.mxu0 %v864
    %1047 = vmatpush1.bf16.msra.mxu0 %v863
    %1048 = vmatprep.subr.bf16.mxu0 %v867
    %1049 = vmatpush1.bf16.msra.mxu0 %v866
    %1050 = vmatprep.subr.bf16.mxu0 %v870
    %1051 = vmatpush1.bf16.msra.mxu0 %v869
    %1052 = vmatprep.subr.bf16.mxu0 %v873
    %1053 = vmatpush1.bf16.msra.mxu0 %v872
    %1054 = vmatprep.subr.bf16.mxu0 %v876
    %1055 = vmatpush1.bf16.msra.mxu0 %v875
    %1056 = vmatprep.subr.bf16.mxu0 %v879
    %1057 = vmatpush1.bf16.msra.mxu0 %v878
    %1058 = vmatprep.subr.bf16.mxu0 %v882
    %1059 = vmatpush1.bf16.msra.mxu0 %v881
    %1060 = vmatprep.mubr.bf16.mxu0 %v369
    %1061 = vmatmul.mubr.bf16.gmra.mrb[0].mxu0 %v368
    %v1062 = vpop.f32.mrb[0].mxu0
    %v1063 = vadd.f32 %v504, %v1062
    %v1064 = vpop.f32.mrb[0].mxu0
    %v1065 = vadd.f32 %v508, %v1064
    %v1066 = vpop.f32.mrb[0].mxu0
    %v1067 = vpop.f32.mrb[0].mxu0
    %1068 = vdwg.mxu0
    %1069 = vmatprep.subr.bf16.mxu0 %v885
    %1070 = vmatpush1.bf16.msra.mxu0 %v884
    %1071 = vmatprep.subr.bf16.mxu0 %v888
    %1072 = vmatpush1.bf16.msra.mxu0 %v887
    %1073 = vmatprep.subr.bf16.mxu0 %v891
    %1074 = vmatpush1.bf16.msra.mxu0 %v890
    %1075 = vmatprep.subr.bf16.mxu0 %v894
    %1076 = vmatpush1.bf16.msra.mxu0 %v893
    %1077 = vmatprep.subr.bf16.mxu0 %v897
    %1078 = vmatpush1.bf16.msra.mxu0 %v896
    %1079 = vmatprep.subr.bf16.mxu0 %v900
    %1080 = vmatpush1.bf16.msra.mxu0 %v899
    %1081 = vmatprep.subr.bf16.mxu0 %v903
    %1082 = vmatpush1.bf16.msra.mxu0 %v902
    %1083 = vmatprep.subr.bf16.mxu0 %v906
    %1084 = vmatpush1.bf16.msra.mxu0 %v905
    %1085 = vmatprep.subr.bf16.mxu0 %v909
    %1086 = vmatpush1.bf16.msra.mxu0 %v908
    %1087 = vmatprep.subr.bf16.mxu0 %v912
    %1088 = vmatpush1.bf16.msra.mxu0 %v911
    %1089 = vmatprep.subr.bf16.mxu0 %v915
    %1090 = vmatpush1.bf16.msra.mxu0 %v914
    %1091 = vmatprep.subr.bf16.mxu0 %v918
    %1092 = vmatpush1.bf16.msra.mxu0 %v917
    %1093 = vmatprep.subr.bf16.mxu0 %v921
    %1094 = vmatpush1.bf16.msra.mxu0 %v920
    %1095 = vmatprep.subr.bf16.mxu0 %v924
    %1096 = vmatpush1.bf16.msra.mxu0 %v923
    %1097 = vmatprep.subr.bf16.mxu0 %v927
    %1098 = vmatpush1.bf16.msra.mxu0 %v926
    %1099 = vmatprep.subr.bf16.mxu0 %v930
    %1100 = vmatpush1.bf16.msra.mxu0 %v929
    %1101 = vmatprep.mubr.bf16.mxu0 %v371
    %1102 = vmatmul.mubr.bf16.gmra.mrb[0].mxu0 %v370
    %v1103 = vpop.f32.mrb[0].mxu0
    %v1104 = vadd.f32 %v1063, %v1103
    %v1105 = vpop.f32.mrb[0].mxu0
    %v1106 = vadd.f32 %v1065, %v1105
    %v1107 = vpop.f32.mrb[0].mxu0
    %v1108 = vpop.f32.mrb[0].mxu0
    %1109 = vdwg.mxu0
    %1110 = vmatprep.subr.bf16.mxu0 0
    %1111 = vmatpush1.bf16.msra.mxu0 %v838
    %1112 = vmatprep.subr.bf16.mxu0 0
    %1113 = vmatpush1.bf16.msra.mxu0 %v841
    %1114 = vmatprep.subr.bf16.mxu0 0
    %1115 = vmatpush1.bf16.msra.mxu0 %v844
    %1116 = vmatprep.subr.bf16.mxu0 0
    %1117 = vmatpush1.bf16.msra.mxu0 %v847
    %1118 = vmatprep.subr.bf16.mxu0 0
    %1119 = vmatpush1.bf16.msra.mxu0 %v850
    %1120 = vmatprep.subr.bf16.mxu0 0
    %1121 = vmatpush1.bf16.msra.mxu0 %v853
    %1122 = vmatprep.subr.bf16.mxu0 0
    %1123 = vmatpush1.bf16.msra.mxu0 %v856
    %1124 = vmatprep.subr.bf16.mxu0 0
    %1125 = vmatpush1.bf16.msra.mxu0 %v859
    %1126 = vmatprep.subr.bf16.mxu0 0
    %1127 = vmatpush1.bf16.msra.mxu0 %v862
    %1128 = vmatprep.subr.bf16.mxu0 0
    %1129 = vmatpush1.bf16.msra.mxu0 %v865
    %1130 = vmatprep.subr.bf16.mxu0 0
    %1131 = vmatpush1.bf16.msra.mxu0 %v868
    %1132 = vmatprep.subr.bf16.mxu0 0
    %1133 = vmatpush1.bf16.msra.mxu0 %v871
    %1134 = vmatprep.subr.bf16.mxu0 0
    %1135 = vmatpush1.bf16.msra.mxu0 %v874
    %1136 = vmatprep.subr.bf16.mxu0 0
    %1137 = vmatpush1.bf16.msra.mxu0 %v877
    %1138 = vmatprep.subr.bf16.mxu0 0
    %1139 = vmatpush1.bf16.msra.mxu0 %v880
    %1140 = vmatprep.subr.bf16.mxu0 0
    %1141 = vmatpush1.bf16.msra.mxu0 %v883
    %1142 = vmatprep.mubr.bf16.mxu0 %v369
    %1143 = vmatmul.mubr.bf16.gmra.mrb[0].mxu0 %v368
    %v1144 = vpop.f32.mrb[0].mxu0
    %v1145 = vadd.f32 %v512, %v1144
    %v1146 = vpop.f32.mrb[0].mxu0
    %v1147 = vpop.f32.mrb[0].mxu0
    %v1148 = vpop.f32.mrb[0].mxu0
    %1149 = vdwg.mxu0
    %1150 = vmatprep.subr.bf16.mxu0 0
    %1151 = vmatpush1.bf16.msra.mxu0 %v886
    %1152 = vmatprep.subr.bf16.mxu0 0
    %1153 = vmatpush1.bf16.msra.mxu0 %v889
    %1154 = vmatprep.subr.bf16.mxu0 0
    %1155 = vmatpush1.bf16.msra.mxu0 %v892
    %1156 = vmatprep.subr.bf16.mxu0 0
    %1157 = vmatpush1.bf16.msra.mxu0 %v895
    %1158 = vmatprep.subr.bf16.mxu0 0
    %1159 = vmatpush1.bf16.msra.mxu0 %v898
    %1160 = vmatprep.subr.bf16.mxu0 0
    %1161 = vmatpush1.bf16.msra.mxu0 %v901
    %1162 = vmatprep.subr.bf16.mxu0 0
    %1163 = vmatpush1.bf16.msra.mxu0 %v904
    %1164 = vmatprep.subr.bf16.mxu0 0
    %1165 = vmatpush1.bf16.msra.mxu0 %v907
    %1166 = vmatprep.subr.bf16.mxu0 0
    %1167 = vmatpush1.bf16.msra.mxu0 %v910
    %1168 = vmatprep.subr.bf16.mxu0 0
    %1169 = vmatpush1.bf16.msra.mxu0 %v913
    %1170 = vmatprep.subr.bf16.mxu0 0
    %1171 = vmatpush1.bf16.msra.mxu0 %v916
    %1172 = vmatprep.subr.bf16.mxu0 0
    %1173 = vmatpush1.bf16.msra.mxu0 %v919
    %1174 = vmatprep.subr.bf16.mxu0 0
    %1175 = vmatpush1.bf16.msra.mxu0 %v922
    %1176 = vmatprep.subr.bf16.mxu0 0
    %1177 = vmatpush1.bf16.msra.mxu0 %v925
    %1178 = vmatprep.subr.bf16.mxu0 0
    %1179 = vmatpush1.bf16.msra.mxu0 %v928
    %1180 = vmatprep.subr.bf16.mxu0 0
    %1181 = vmatpush1.bf16.msra.mxu0 %v931
    %1182 = vmatprep.mubr.bf16.mxu0 %v371
    %1183 = vmatmul.mubr.bf16.gmra.mrb[0].mxu0 %v370
    %v1184 = vpop.f32.mrb[0].mxu0
    %v1185 = vadd.f32 %v1145, %v1184
    %v1186 = vpop.f32.mrb[0].mxu0
    %v1187 = vpop.f32.mrb[0].mxu0
    %v1188 = vpop.f32.mrb[0].mxu0
    %1189 = vdwg.mxu0
    %v1190 = vmax.f32 %v1104, 0.0
    %v1191 = vmax.f32 %v1106, 0.0
    %v1192 = vmax.f32 %v1185, 0.0
    %v1193 = vpack.c.bf16 %v1190, %v1190
    %v1194 = vpack.c.bf16 %v1191, %v1191
    %v1195 = vpack.c.bf16 %v1192, %v1192
    %v1196 = vld [vmem:[%s3] sm:$0xf]
    %v1197 = vld [vmem:[%s3 + $0x4] sm:$0xf]
    %v1198 = vld [vmem:[%s3 + $0x8] sm:$0xf]
    %v1199 = vld [vmem:[%s3 + $0xc] sm:$0xf]
    %v1200 = vld [vmem:[%s3 + $0x10] sm:$0xf]
    %v1201 = vld [vmem:[%s3 + $0x14] sm:$0xf]
    %v1202 = vld [vmem:[%s3 + $0x18] sm:$0xf]
    %v1203 = vld [vmem:[%s3 + $0x1c] sm:$0xf]
    %v1204 = vld [vmem:[%s3 + $0x20] sm:$0xf]
    %v1205 = vld [vmem:[%s3 + $0x24] sm:$0xf]
    %v1206 = vld [vmem:[%s3 + $0x28] sm:$0xf]
    %v1207 = vld [vmem:[%s3 + $0x2c] sm:$0xf]
    %v1208 = vld [vmem:[%s3 + $0x30] sm:$0xf]
    %v1209 = vld [vmem:[%s3 + $0x34] sm:$0xf]
    %v1210 = vld [vmem:[%s3 + $0x38] sm:$0xf]
    %v1211 = vld [vmem:[%s3 + $0x3c] sm:$0xf]
    %v1212 = vld [vmem:[%s3 + $0x40] sm:$0xf]
    %v1213 = vld [vmem:[%s3 + $0x44] sm:$0xf]
    %v1214 = vld [vmem:[%s3 + $0x48] sm:$0xf]
    %v1215 = vld [vmem:[%s3 + $0x4c] sm:$0xf]
    %v1216 = vld [vmem:[%s3 + $0x50] sm:$0xf]
    %v1217 = vld [vmem:[%s3 + $0x54] sm:$0xf]
    %v1218 = vld [vmem:[%s3 + $0x58] sm:$0xf]
    %v1219 = vld [vmem:[%s3 + $0x5c] sm:$0xf]
    %v1220 = vld [vmem:[%s3 + $0x60] sm:$0xf]
    %v1221 = vld [vmem:[%s3 + $0x64] sm:$0xf]
    %v1222 = vld [vmem:[%s3 + $0x68] sm:$0xf]
    %v1223 = vld [vmem:[%s3 + $0x6c] sm:$0xf]
    %v1224 = vld [vmem:[%s3 + $0x70] sm:$0xf]
    %v1225 = vld [vmem:[%s3 + $0x74] sm:$0xf]
    %v1226 = vld [vmem:[%s3 + $0x78] sm:$0xf]
    %v1227 = vld [vmem:[%s3 + $0x7c] sm:$0xf]
    %v1228 = vld [vmem:[%s3 + $0x80] sm:$0xf]
    %v1229 = vld [vmem:[%s3 + $0x84] sm:$0xf]
    %v1230 = vld [vmem:[%s3 + $0x88] sm:$0xf]
    %v1231 = vld [vmem:[%s3 + $0x8c] sm:$0xf]
    %v1232 = vld [vmem:[%s3 + $0x90] sm:$0xf]
    %v1233 = vld [vmem:[%s3 + $0x94] sm:$0xf]
    %v1234 = vld [vmem:[%s3 + $0x98] sm:$0xf]
    %v1235 = vld [vmem:[%s3 + $0x9c] sm:$0xf]
    %v1236 = vld [vmem:[%s3 + $0xa0] sm:$0xf]
    %v1237 = vld [vmem:[%s3 + $0xa4] sm:$0xf]
    %v1238 = vld [vmem:[%s3 + $0xa8] sm:$0xf]
    %v1239 = vld [vmem:[%s3 + $0xac] sm:$0xf]
    %v1240 = vld [vmem:[%s3 + $0xb0] sm:$0xf]
    %v1241 = vld [vmem:[%s3 + $0xb4] sm:$0xf]
    %v1242 = vld [vmem:[%s3 + $0xb8] sm:$0xf]
    %v1243 = vld [vmem:[%s3 + $0xbc] sm:$0xf]
    %v1244 = vlaneseq
    %v1245 = vshrl.u32 %v1244, 7
    %v1246 = vsub.s32 0, %v1245
    %v1247 = vrot.slane %v40, %v1246
    %v1296 = vunpack.c.l.b16 %v1196
    %v1297 = vunpack.c.l.b16 %v1197
    %v1298 = vunpack.c.l.b16 %v1198
    %v1299 = vunpack.c.l.b16 %v1199
    %v1300 = vunpack.c.l.b16 %v1200
    %v1301 = vunpack.c.l.b16 %v1201
    %v1302 = vunpack.c.l.b16 %v1202
    %v1303 = vunpack.c.l.b16 %v1203
    %v1304 = vunpack.c.l.b16 %v1204
    %v1305 = vunpack.c.l.b16 %v1205
    %v1306 = vunpack.c.l.b16 %v1206
    %v1307 = vunpack.c.l.b16 %v1207
    %v1308 = vunpack.c.l.b16 %v1208
    %v1309 = vunpack.c.l.b16 %v1209
    %v1310 = vunpack.c.l.b16 %v1210
    %v1311 = vunpack.c.l.b16 %v1211
    %v1312 = vunpack.c.l.b16 %v1212
    %v1313 = vunpack.c.l.b16 %v1213
    %v1314 = vunpack.c.l.b16 %v1214
    %v1315 = vunpack.c.l.b16 %v1215
    %v1316 = vunpack.c.l.b16 %v1216
    %v1317 = vunpack.c.l.b16 %v1217
    %v1318 = vunpack.c.l.b16 %v1218
    %v1319 = vunpack.c.l.b16 %v1219
    %v1320 = vunpack.c.l.b16 %v1220
    %v1321 = vunpack.c.l.b16 %v1221
    %v1322 = vunpack.c.l.b16 %v1222
    %v1323 = vunpack.c.l.b16 %v1223
    %v1324 = vunpack.c.l.b16 %v1224
    %v1325 = vunpack.c.l.b16 %v1225
    %v1326 = vunpack.c.l.b16 %v1226
    %v1327 = vunpack.c.l.b16 %v1227
    %v1328 = vunpack.c.l.b16 %v1228
    %v1329 = vunpack.c.l.b16 %v1229
    %v1330 = vunpack.c.l.b16 %v1230
    %v1331 = vunpack.c.l.b16 %v1231
    %v1332 = vunpack.c.l.b16 %v1232
    %v1333 = vunpack.c.l.b16 %v1233
    %v1334 = vunpack.c.l.b16 %v1234
    %v1335 = vunpack.c.l.b16 %v1235
    %v1336 = vunpack.c.l.b16 %v1236
    %v1337 = vunpack.c.l.b16 %v1237
    %v1338 = vunpack.c.l.b16 %v1238
    %v1339 = vunpack.c.l.b16 %v1239
    %v1340 = vunpack.c.l.b16 %v1240
    %v1341 = vunpack.c.l.b16 %v1241
    %v1342 = vunpack.c.l.b16 %v1242
    %v1343 = vunpack.c.l.b16 %v1243
    %v1344 = vpack.c.b16 %v1297, %v1296
    %v1345 = vpack.c.b16 %v1299, %v1298
    %v1346 = vpack.c.b16 %v1301, %v1300
    %v1347 = vpack.c.b16 %v1303, %v1302
    %v1348 = vpack.c.b16 %v1305, %v1304
    %v1349 = vpack.c.b16 %v1307, %v1306
    %v1350 = vpack.c.b16 %v1309, %v1308
    %v1351 = vpack.c.b16 %v1311, %v1310
    %v1352 = vpack.c.b16 %v1313, %v1312
    %v1353 = vpack.c.b16 %v1315, %v1314
    %v1354 = vpack.c.b16 %v1317, %v1316
    %v1355 = vpack.c.b16 %v1319, %v1318
    %v1356 = vpack.c.b16 %v1321, %v1320
    %v1357 = vpack.c.b16 %v1323, %v1322
    %v1358 = vpack.c.b16 %v1325, %v1324
    %v1359 = vpack.c.b16 %v1327, %v1326
    %v1360 = vpack.c.b16 %v1329, %v1328
    %v1361 = vpack.c.b16 %v1331, %v1330
    %v1362 = vpack.c.b16 %v1333, %v1332
    %v1363 = vpack.c.b16 %v1335, %v1334
    %v1364 = vpack.c.b16 %v1337, %v1336
    %v1365 = vpack.c.b16 %v1339, %v1338
    %v1366 = vpack.c.b16 %v1341, %v1340
    %v1367 = vpack.c.b16 %v1343, %v1342
    %1392 = vmatprep.subr.bf16.mxu0 0
    %1393 = vmatpush1.bf16.msra.mxu0 %v1344
    %1394 = vmatprep.subr.bf16.mxu0 0
    %1395 = vmatpush1.bf16.msra.mxu0 %v1345
    %1396 = vmatprep.subr.bf16.mxu0 0
    %1397 = vmatpush1.bf16.msra.mxu0 %v1346
    %1398 = vmatprep.subr.bf16.mxu0 0
    %1399 = vmatpush1.bf16.msra.mxu0 %v1347
    %1400 = vmatprep.subr.bf16.mxu0 0
    %1401 = vmatpush1.bf16.msra.mxu0 %v1348
    %1402 = vmatprep.subr.bf16.mxu0 0
    %1403 = vmatpush1.bf16.msra.mxu0 %v1349
    %1404 = vmatprep.subr.bf16.mxu0 0
    %1405 = vmatpush1.bf16.msra.mxu0 %v1350
    %1406 = vmatprep.subr.bf16.mxu0 0
    %1407 = vmatpush1.bf16.msra.mxu0 %v1351
    %1408 = vmatprep.subr.bf16.mxu0 0
    %1409 = vmatpush1.bf16.msra.mxu0 %v1352
    %1410 = vmatprep.subr.bf16.mxu0 0
    %1411 = vmatpush1.bf16.msra.mxu0 %v1353
    %1412 = vmatprep.subr.bf16.mxu0 0
    %1413 = vmatpush1.bf16.msra.mxu0 %v1354
    %1414 = vmatprep.subr.bf16.mxu0 0
    %1415 = vmatpush1.bf16.msra.mxu0 %v1355
    %1416 = vmatprep.subr.bf16.mxu0 0
    %1417 = vmatpush1.bf16.msra.mxu0 %v1356
    %1418 = vmatprep.subr.bf16.mxu0 0
    %1419 = vmatpush1.bf16.msra.mxu0 %v1357
    %1420 = vmatprep.subr.bf16.mxu0 0
    %1421 = vmatpush1.bf16.msra.mxu0 %v1358
    %1422 = vmatprep.subr.bf16.mxu0 0
    %1423 = vmatpush1.bf16.msra.mxu0 %v1359
    %1424 = vmatprep.mubr.bf16.mxu0 %v1194
    %1425 = vmatmul.mubr.bf16.gmra.mrb[0].mxu0 %v1193
    %v1426 = vpop.f32.mrb[0].mxu0
    %v1427 = vadd.f32 %v1247, %v1426
    %v1428 = vpop.f32.mrb[0].mxu0
    %v1429 = vpop.f32.mrb[0].mxu0
    %v1430 = vpop.f32.mrb[0].mxu0
    %1431 = vdwg.mxu0
    %1432 = vmatprep.subr.bf16.mxu0 0
    %1433 = vmatpush1.bf16.msra.mxu0 %v1360
    %1434 = vmatprep.subr.bf16.mxu0 0
    %1435 = vmatpush1.bf16.msra.mxu0 %v1361
    %1436 = vmatprep.subr.bf16.mxu0 0
    %1437 = vmatpush1.bf16.msra.mxu0 %v1362
    %1438 = vmatprep.subr.bf16.mxu0 0
    %1439 = vmatpush1.bf16.msra.mxu0 %v1363
    %1440 = vmatprep.subr.bf16.mxu0 0
    %1441 = vmatpush1.bf16.msra.mxu0 %v1364
    %1442 = vmatprep.subr.bf16.mxu0 0
    %1443 = vmatpush1.bf16.msra.mxu0 %v1365
    %1444 = vmatprep.subr.bf16.mxu0 0
    %1445 = vmatpush1.bf16.msra.mxu0 %v1366
    %1446 = vmatprep.subr.bf16.mxu0 0
    %1447 = vmatpush1.bf16.msra.mxu0 %v1367
    %1448 = vmatprep.subr.bf16.mxu0 0
    %1449 = vmatpush1.bf16.msra.mxu0 0
    %1450 = vmatprep.subr.bf16.mxu0 0
    %1451 = vmatpush1.bf16.msra.mxu0 0
    %1452 = vmatprep.subr.bf16.mxu0 0
    %1453 = vmatpush1.bf16.msra.mxu0 0
    %1454 = vmatprep.subr.bf16.mxu0 0
    %1455 = vmatpush1.bf16.msra.mxu0 0
    %1456 = vmatprep.subr.bf16.mxu0 0
    %1457 = vmatpush1.bf16.msra.mxu0 0
    %1458 = vmatprep.subr.bf16.mxu0 0
    %1459 = vmatpush1.bf16.msra.mxu0 0
    %1460 = vmatprep.subr.bf16.mxu0 0
    %1461 = vmatpush1.bf16.msra.mxu0 0
    %1462 = vmatprep.subr.bf16.mxu0 0
    %1463 = vmatpush1.bf16.msra.mxu0 0
    %1464 = vmatprep.mubr.bf16.mxu0 0
    %1465 = vmatmul.mubr.bf16.gmra.mrb[0].mxu0 %v1195
    %v1466 = vpop.f32.mrb[0].mxu0
    %v1467 = vadd.f32 %v1427, %v1466
    %v1468 = vpop.f32.mrb[0].mxu0
    %v1469 = vpop.f32.mrb[0].mxu0
    %v1470 = vpop.f32.mrb[0].mxu0
    %1471 = vdwg.mxu0
    %v1472 = vtanh.pop %v1467
    %vm1473 = vcmask 31744
    %1474 = vst.msk [vmem:[%s5] sm:$0xff] %vm1473, %v1472
    // Predicated region
    $region26: #{tpu_custom_call.1} parent=1 // pred_check
      _
    $region27: #{tpu_custom_call.1} parent=1 // pred_check_branch
      %1476 = sbr.rel (0) target = $region29
    $region28: #{tpu_custom_call.1} parent=1 // pred_region
      _
    $region29: #{tpu_custom_call.1} parent=1 // pred_fallthru
      _
    // Predicated region
    $region30: #{tpu_custom_call.1} parent=1 // pred_check
      _
    $region31: #{tpu_custom_call.1} parent=1 // pred_check_branch
      %1478 = sbr.rel (0) target = $region33
    $region32: #{tpu_custom_call.1} parent=1 // pred_region
      _
    $region33: #{tpu_custom_call.1} parent=1 // pred_fallthru
      _
    %1479 = vsyncpa [#allocation3], 1

</llo_original>
